<compile_context>
chip_gen: v5e
topology: v5e:2x2
jax: 0.10.0
libtpu: 0.0.40
codegen_flags: <defaults>
</compile_context>

<pallas_src>
import jax
import jax.numpy as jnp
from jax.experimental import pallas as pl
from jax.experimental.pallas import tpu as pltpu


def _ffn_kernel(x_ref, w1_ref, b1_ref, w2_ref, b2_ref, o_ref, acc_ref):
    h_step = pl.program_id(1)

    @pl.when(h_step == 0)
    def _init():
        acc_ref[...] = jnp.zeros_like(acc_ref)

    # First matmul (MXU), f32 accumulate, + per-hidden-column bias.
    h = jnp.dot(x_ref[...], w1_ref[...], preferred_element_type=jnp.float32)
    h = h + b1_ref[...].astype(jnp.float32)

    # tanh-approx GELU (same math as the PyTorch GELU module), factored form.
    c = jnp.float32((2.0 / jnp.pi) ** 0.5)
    h = h * (0.5 + 0.5 * jnp.tanh(c * h * (1.0 + 0.044715 * (h * h))))

    # Second matmul, accumulated over H tiles into f32 scratch.
    acc_ref[...] += jnp.dot(h.astype(w2_ref.dtype), w2_ref[...],
                            preferred_element_type=jnp.float32)

    @pl.when(h_step == pl.num_programs(1) - 1)
    def _finalize():
        o_ref[...] = (acc_ref[...] + b2_ref[...].astype(jnp.float32)).astype(o_ref.dtype)


def _round_up(n, m):
    return ((n + m - 1) // m) * m


def feed_forward(x, w1, b1, w2, b2, *, tm=256, th=512):
    """x: [B, S, E]; w1: [E, H]; b1: [H]; w2: [H, E]; b2: [E] -> [B, S, E]."""
    B, S, E = x.shape
    H = w1.shape[1]
    M = B * S

    # Tile sizes: lane-dense last dims (multiples of 128), sublane-friendly TM.
    E_pad = _round_up(E, 128)
    TM = min(tm, _round_up(M, 16))
    M_pad = _round_up(M, TM)
    TH = min(th, _round_up(H, 128))
    H_pad = _round_up(H, TH)

    # Zero-padding is semantically transparent: padded hidden columns are
    # GELU(0) = 0 and meet zero rows of W2; padded output rows/cols are sliced off.
    x_p = jnp.pad(x.reshape(M, E), ((0, M_pad - M), (0, E_pad - E)))
    w1_p = jnp.pad(w1, ((0, E_pad - E), (0, H_pad - H)))
    b1_p = jnp.pad(b1, (0, H_pad - H)).reshape(1, H_pad)
    w2_p = jnp.pad(w2, ((0, H_pad - H), (0, E_pad - E)))
    b2_p = jnp.pad(b2, (0, E_pad - E)).reshape(1, E_pad)

    grid = (M_pad // TM, H_pad // TH)

    # Rough VMEM budget (double-buffered tiles + accumulator + hidden), clamped
    # to the smallest per-generation capacity (v7x: 64 MiB).
    def _nbytes(shape, dt):
        n = 1
        for d in shape:
            n *= d
        return n * jnp.dtype(dt).itemsize

    tile_bytes = (
        2 * _nbytes((TM, E_pad), x.dtype)
        + 2 * _nbytes((E_pad, TH), w1.dtype)
        + 2 * _nbytes((1, TH), b1.dtype)
        + 2 * _nbytes((TH, E_pad), w2.dtype)
        + 2 * _nbytes((1, E_pad), b2.dtype)
        + 2 * _nbytes((TM, E_pad), x.dtype)          # output tiles
        + _nbytes((TM, E_pad), jnp.float32)          # accumulator scratch
        + _nbytes((TM, TH), jnp.float32)             # hidden intermediate
    )
    vmem_limit = int(min(64 * 1024 * 1024, max(32 * 1024 * 1024, 2 * tile_bytes)))

    cost = pl.CostEstimate(
        flops=4 * M * E * H,                         # two matmuls, 2 flops/MAC
        transcendentals=M * H,                       # one tanh per hidden element
        bytes_accessed=(x_p.size * x_p.dtype.itemsize
                        + w1_p.size * w1_p.dtype.itemsize
                        + w2_p.size * w2_p.dtype.itemsize
                        + b1_p.size * b1_p.dtype.itemsize
                        + b2_p.size * b2_p.dtype.itemsize
                        + M_pad * E_pad * x.dtype.itemsize),
    )

    out_p = pl.pallas_call(
        _ffn_kernel,
        out_shape=jax.ShapeDtypeStruct((M_pad, E_pad), x.dtype),
        grid=grid,
        in_specs=[
            pl.BlockSpec((TM, E_pad), lambda m, h: (m, 0)),   # x row tile
            pl.BlockSpec((E_pad, TH), lambda m, h: (0, h)),   # W1 column tile
            pl.BlockSpec((1, TH), lambda m, h: (0, h)),       # b1 tile
            pl.BlockSpec((TH, E_pad), lambda m, h: (h, 0)),   # W2 row tile
            pl.BlockSpec((1, E_pad), lambda m, h: (0, 0)),    # b2 (VMEM-resident)
        ],
        out_specs=pl.BlockSpec((TM, E_pad), lambda m, h: (m, 0)),
        scratch_shapes=[pltpu.VMEM((TM, E_pad), jnp.float32)],
        compiler_params=pltpu.CompilerParams(
            dimension_semantics=("parallel", "arbitrary"),
            vmem_limit_bytes=vmem_limit,
        ),
        cost_estimate=cost,
    )(x_p, w1_p, b1_p, w2_p, b2_p)

    return out_p[:M, :E].reshape(B, S, E)


def _reference(x, w1, b1, w2, b2):
    h = jnp.einsum("bse,eh->bsh", x, w1) + b1
    c = (2.0 / jnp.pi) ** 0.5
    h = h * 0.5 * (1.0 + jnp.tanh(c * (h + 0.044715 * h ** 3)))
    return jnp.einsum("bsh,he->bse", h, w2) + b2


if __name__ == "__main__":
    # --- Case 1: small config consistent with FeedForward(cfg): emb_dim=32 -> hidden=128
    batch, seq, emb_dim = 2, 8, 32
    hidden = 4 * emb_dim

    key = jax.random.PRNGKey(0)
    k_x, k_w1, k_b1, k_w2, k_b2 = jax.random.split(key, 5)
    x = jax.random.normal(k_x, (batch, seq, emb_dim), dtype=jnp.float32)
    w1 = jax.random.normal(k_w1, (emb_dim, hidden), dtype=jnp.float32) * 0.02
    b1 = jax.random.normal(k_b1, (hidden,), dtype=jnp.float32) * 0.02
    w2 = jax.random.normal(k_w2, (hidden, emb_dim), dtype=jnp.float32) * 0.02
    b2 = jax.random.normal(k_b2, (emb_dim,), dtype=jnp.float32) * 0.02

    out = feed_forward(x, w1, b1, w2, b2)
    jax.block_until_ready(out)
    ref = _reference(x, w1, b1, w2, b2)
    assert out.shape == (batch, seq, emb_dim)
    assert jnp.allclose(out, ref, atol=1e-5, rtol=1e-5), "mismatch vs reference (small)"

    # --- Case 2: exercises the multi-tile path (2 M-tiles x 2 H-tiles, padded dims)
    batch2, seq2, emb2 = 3, 100, 160
    hidden2 = 4 * emb2
    k_x, k_w1, k_b1, k_w2, k_b2 = jax.random.split(jax.random.PRNGKey(1), 5)
    x2 = jax.random.normal(k_x, (batch2, seq2, emb2), dtype=jnp.float32)
    w1_2 = jax.random.normal(k_w1, (emb2, hidden2), dtype=jnp.float32) * 0.02
    b1_2 = jax.random.normal(k_b1, (hidden2,), dtype=jnp.float32) * 0.02
    w2_2 = jax.random.normal(k_w2, (hidden2, emb2), dtype=jnp.float32) * 0.02
    b2_2 = jax.random.normal(k_b2, (emb2,), dtype=jnp.float32) * 0.02

    out2 = feed_forward(x2, w1_2, b1_2, w2_2, b2_2)
    jax.block_until_ready(out2)
    ref2 = _reference(x2, w1_2, b1_2, w2_2, b2_2)
    assert out2.shape == (batch2, seq2, emb2)
    assert jnp.allclose(out2, ref2, atol=2e-3, rtol=2e-3), "mismatch vs reference (tiled)"

    print("KERNEL_OK")
</pallas_src>

<mosaic_0001>
module attributes {stable_mosaic.version = 11 : i64} {
  func.func @_ffn_kernel(%arg0: i32, %arg1: i32, %arg2: memref<16x128xf32, #tpu.memory_space<vmem>>, %arg3: memref<128x128xf32, #tpu.memory_space<vmem>>, %arg4: memref<1x128xf32, #tpu.memory_space<vmem>>, %arg5: memref<128x128xf32, #tpu.memory_space<vmem>>, %arg6: memref<1x128xf32, #tpu.memory_space<vmem>>, %arg7: memref<16x128xf32, #tpu.memory_space<vmem>>, %arg8: memref<16x128xf32, #tpu.memory_space<vmem>>) attributes {dimension_semantics = [#tpu.dimension_semantics<parallel>, #tpu.dimension_semantics<arbitrary>], iteration_bounds = array<i64: 1, 1>, scalar_prefetch = 0 : i64, scratch_operands = 1 : i64, tpu.core_type = #tpu.core_type<tc>, window_params = [{transform_indices = @transform_0, window_bounds = array<i64: 16, 128>}, {transform_indices = @transform_1, window_bounds = array<i64: 128, 128>}, {transform_indices = @transform_2, window_bounds = array<i64: 1, 128>}, {transform_indices = @transform_3, window_bounds = array<i64: 128, 128>}, {pipeline_mode = #tpu.pipeline_mode<synchronous>, transform_indices = @transform_4, window_bounds = array<i64: 1, 128>}, {transform_indices = @transform_5, window_bounds = array<i64: 16, 128>}]} {
    %c0_i32 = arith.constant 0 : i32
    %0 = arith.cmpi eq, %arg1, %c0_i32 : i32
    %1 = arith.extui %0 : i1 to i32
    %c0_i32_0 = arith.constant 0 : i32
    %2 = arith.cmpi ne, %1, %c0_i32_0 : i32
    scf.if %2 {
      %cst_20 = arith.constant 0.000000e+00 : f32
      %31 = vector.broadcast %cst_20 : f32 to vector<16x128xf32>
      %c0_21 = arith.constant 0 : index
      %c0_22 = arith.constant 0 : index
      %32 = vector.load %arg8[%c0_21, %c0_22] : memref<16x128xf32, #tpu.memory_space<vmem>>, vector<16x128xf32>
      tpu.vector_store %arg8[%c0_21, %c0_22], %31 {strides = array<i32>} : memref<16x128xf32, #tpu.memory_space<vmem>>, vector<16x128xf32>,
    } else {
    }
    %c0 = arith.constant 0 : index
    %c0_1 = arith.constant 0 : index
    %3 = vector.load %arg2[%c0, %c0_1] : memref<16x128xf32, #tpu.memory_space<vmem>>, vector<16x128xf32>
    %c0_2 = arith.constant 0 : index
    %c0_3 = arith.constant 0 : index
    %4 = vector.load %arg3[%c0_2, %c0_3] : memref<128x128xf32, #tpu.memory_space<vmem>>, vector<128x128xf32>
    %cst = arith.constant dense<0.000000e+00> : vector<16x128xf32>
    %5 = tpu.matmul %3, %4, %cst {dimension_numbers = #tpu.dot_dimension_numbers<[1], [0], [0], [1], [0, 0, 1, 1], [], []>} : vector<16x128xf32>, vector<128x128xf32>, vector<16x128xf32> -> vector<16x128xf32>
    %c0_4 = arith.constant 0 : index
    %c0_5 = arith.constant 0 : index
    %6 = vector.load %arg4[%c0_4, %c0_5] : memref<1x128xf32, #tpu.memory_space<vmem>>, vector<1x128xf32>
    %7 = vector.broadcast %6 : vector<1x128xf32> to vector<16x128xf32>
    %8 = arith.addf %5, %7 : vector<16x128xf32>
    %cst_6 = arith.constant 0.797884583 : f32
    %9 = vector.broadcast %cst_6 : f32 to vector<16x128xf32>
    %10 = arith.mulf %9, %8 : vector<16x128xf32>
    %11 = arith.mulf %8, %8 : vector<16x128xf32>
    %cst_7 = arith.constant 4.471500e-02 : f32
    %12 = vector.broadcast %cst_7 : f32 to vector<16x128xf32>
    %13 = arith.mulf %12, %11 : vector<16x128xf32>
    %cst_8 = arith.constant 1.000000e+00 : f32
    %14 = vector.broadcast %cst_8 : f32 to vector<16x128xf32>
    %15 = arith.addf %14, %13 : vector<16x128xf32>
    %16 = arith.mulf %10, %15 : vector<16x128xf32>
    %17 = math.tanh %16 : vector<16x128xf32>
    %cst_9 = arith.constant 5.000000e-01 : f32
    %18 = vector.broadcast %cst_9 : f32 to vector<16x128xf32>
    %19 = arith.mulf %18, %17 : vector<16x128xf32>
    %cst_10 = arith.constant 5.000000e-01 : f32
    %20 = vector.broadcast %cst_10 : f32 to vector<16x128xf32>
    %21 = arith.addf %20, %19 : vector<16x128xf32>
    %22 = arith.mulf %8, %21 : vector<16x128xf32>
    %c0_11 = arith.constant 0 : index
    %c0_12 = arith.constant 0 : index
    %23 = vector.load %arg8[%c0_11, %c0_12] : memref<16x128xf32, #tpu.memory_space<vmem>>, vector<16x128xf32>
    %c0_13 = arith.constant 0 : index
    %c0_14 = arith.constant 0 : index
    %24 = vector.load %arg5[%c0_13, %c0_14] : memref<128x128xf32, #tpu.memory_space<vmem>>, vector<128x128xf32>
    %cst_15 = arith.constant dense<0.000000e+00> : vector<16x128xf32>
    %25 = tpu.matmul %22, %24, %cst_15 {dimension_numbers = #tpu.dot_dimension_numbers<[1], [0], [0], [1], [0, 0, 1, 1], [], []>} : vector<16x128xf32>, vector<128x128xf32>, vector<16x128xf32> -> vector<16x128xf32>
    %26 = arith.addf %23, %25 : vector<16x128xf32>
    %c0_16 = arith.constant 0 : index
    %c0_17 = arith.constant 0 : index
    %27 = vector.load %arg8[%c0_16, %c0_17] : memref<16x128xf32, #tpu.memory_space<vmem>>, vector<16x128xf32>
    tpu.vector_store %arg8[%c0_16, %c0_17], %26 {strides = array<i32>} : memref<16x128xf32, #tpu.memory_space<vmem>>, vector<16x128xf32>,
    %c0_i32_18 = arith.constant 0 : i32
    %28 = arith.cmpi eq, %arg1, %c0_i32_18 : i32
    %29 = arith.extui %28 : i1 to i32
    %c0_i32_19 = arith.constant 0 : i32
    %30 = arith.cmpi ne, %29, %c0_i32_19 : i32
    scf.if %30 {
      %c0_20 = arith.constant 0 : index
      %c0_21 = arith.constant 0 : index
      %31 = vector.load %arg8[%c0_20, %c0_21] : memref<16x128xf32, #tpu.memory_space<vmem>>, vector<16x128xf32>
      %c0_22 = arith.constant 0 : index
      %c0_23 = arith.constant 0 : index
      %32 = vector.load %arg6[%c0_22, %c0_23] : memref<1x128xf32, #tpu.memory_space<vmem>>, vector<1x128xf32>
      %33 = vector.broadcast %32 : vector<1x128xf32> to vector<16x128xf32>
      %34 = arith.addf %31, %33 : vector<16x128xf32>
      %c0_24 = arith.constant 0 : index
      %c0_25 = arith.constant 0 : index
      %35 = vector.load %arg7[%c0_24, %c0_25] : memref<16x128xf32, #tpu.memory_space<vmem>>, vector<16x128xf32>
      tpu.vector_store %arg7[%c0_24, %c0_25], %34 {strides = array<i32>} : memref<16x128xf32, #tpu.memory_space<vmem>>, vector<16x128xf32>,
    } else {
    }
    return
  }
  func.func @transform_0(%arg0: i32, %arg1: i32) -> (i32, i32) {
    %c0_i32 = arith.constant 0 : i32
    %c0_i32_0 = arith.constant 0 : i32
    return %arg0, %c0_i32 : i32, i32
  }
  func.func @transform_1(%arg0: i32, %arg1: i32) -> (i32, i32) {
    %c0_i32 = arith.constant 0 : i32
    %c0_i32_0 = arith.constant 0 : i32
    return %c0_i32, %arg1 : i32, i32
  }
  func.func @transform_2(%arg0: i32, %arg1: i32) -> (i32, i32) {
    %c0_i32 = arith.constant 0 : i32
    %c0_i32_0 = arith.constant 0 : i32
    return %c0_i32, %arg1 : i32, i32
  }
  func.func @transform_3(%arg0: i32, %arg1: i32) -> (i32, i32) {
    %c0_i32 = arith.constant 0 : i32
    %c0_i32_0 = arith.constant 0 : i32
    return %arg1, %c0_i32 : i32, i32
  }
  func.func @transform_4(%arg0: i32, %arg1: i32) -> (i32, i32) {
    %c0_i32 = arith.constant 0 : i32
    %c0_i32_0 = arith.constant 0 : i32
    %c0_i32_1 = arith.constant 0 : i32
    return %c0_i32, %c0_i32_0 : i32, i32
  }
  func.func @transform_5(%arg0: i32, %arg1: i32) -> (i32, i32) {
    %c0_i32 = arith.constant 0 : i32
    %c0_i32_0 = arith.constant 0 : i32
    return %arg0, %c0_i32 : i32, i32
  }
}

</mosaic_0001>

<llo_original>
// kernel: tpu_custom_call.1
$region0: #{tpu_custom_call.1}
  #allocation0 [shape = 'u32[]', space=smem, size = 0x4, offset = 0x4, fixed_abs, tag = 'smem constant byte address 0x4 - core index']
  #allocation1 [shape = 'u32[72,128]{1,0:T(1,128)}', space=vmem, size = 0x9000, scoped, tag = 'internal scratch']
  #allocation2 [shape = 'f32[16,128]{1,0:T(8,128)}', space=vmem, size = 0x2000, scoped, tag = 'scratch operand']
  %s0 = inlined_call_operand.hbm [shape: f32[16,128], index: 0, kind: input, shape index: {}]
  %s1 = inlined_call_operand.hbm [shape: f32[128,128], index: 1, kind: input, shape index: {}]
  %s2 = inlined_call_operand.vmem [shape: f32[1,128], index: 2, kind: input, shape index: {}]
  %s3 = inlined_call_operand.hbm [shape: f32[128,128], index: 3, kind: input, shape index: {}]
  %s4 = inlined_call_operand.vmem [shape: f32[1,128], index: 4, kind: input, shape index: {}]
  %s5 = inlined_call_operand.hbm [shape: f32[16,128], index: 5, kind: output, shape index: {}]
  %s6 = sld [smem:[#allocation0]]
  $region50: #{tpu_custom_call.1} parent=0
    _
  %s8 = ssub.s32 1, %s6
  %s9 = scalar_select 0, %s8, %s6
  $region1: #{tpu_custom_call.1} parent=0
    #allocation3 [shape = 'u8[8192]{0}', space=vmem, size = 0x2000, scoped, tag = 'input window, operand 0, single buffered']
    #allocation4 [shape = 's32[1]{0}', space=sflag, size = 0x4, scoped, tag = 'scoped memory for tpu_custom_call.1']
    #allocation5 [shape = 's32[1]{0}', space=sflag, size = 0x4, scoped, tag = 'scoped memory for tpu_custom_call.1']
    #allocation6 [shape = 'u8[65536]{0}', space=vmem, size = 0x10000, scoped, tag = 'input window, operand 1, single buffered']
    #allocation7 [shape = 's32[1]{0}', space=sflag, size = 0x4, scoped, tag = 'scoped memory for tpu_custom_call.1']
    #allocation8 [shape = 'u8[65536]{0}', space=vmem, size = 0x10000, scoped, tag = 'input window, operand 3, single buffered']
    #allocation9 [shape = 'u8[8192]{0}', space=vmem, size = 0x2000, scoped, tag = 'output window, operand 0, single buffered']
    %10 = vsyncpa [#allocation4], 0
    %11 = vsyncpa [#allocation7], 0
    %12 = vsyncpa [#allocation5], 0
    // Predicated region
    $region2: #{tpu_custom_call.1} parent=1 // pred_check
      _
    $region3: #{tpu_custom_call.1} parent=1 // pred_check_branch
      %14 = sbr.rel (0) target = $region5
    $region4: #{tpu_custom_call.1} parent=1 // pred_region
      %16 = vsyncadd [#allocation4], 0
      %s17 = sshll.u32 %s0, 4
      %s18 = int_to_ptr.hbm [resolvable:$true] %s17
      %s19 = sshll.u32 [#allocation3], 4
      %s20 = int_to_ptr.vmem [resolvable:$true] %s19
      %25 = dma.hbm_to_vmem [thread:$0]  %s18, 256, %s20, [#allocation4], 128, 128, 8
    $region5: #{tpu_custom_call.1} parent=1 // pred_fallthru
      _
    // Predicated region
    $region6: #{tpu_custom_call.1} parent=1 // pred_check
      _
    $region7: #{tpu_custom_call.1} parent=1 // pred_check_branch
      %27 = sbr.rel (0) target = $region9
    $region8: #{tpu_custom_call.1} parent=1 // pred_region
      %29 = vsyncadd [#allocation7], 0
      %s30 = sshll.u32 %s1, 4
      %s31 = int_to_ptr.hbm [resolvable:$true] %s30
      %s32 = sshll.u32 [#allocation6], 4
      %s33 = int_to_ptr.vmem [resolvable:$true] %s32
      %38 = dma.hbm_to_vmem [thread:$0]  %s31, 2048, %s33, [#allocation7], 128, 128, 8
    $region9: #{tpu_custom_call.1} parent=1 // pred_fallthru
      _
    // Predicated region
    $region10: #{tpu_custom_call.1} parent=1 // pred_check
      _
    $region11: #{tpu_custom_call.1} parent=1 // pred_check_branch
      %40 = sbr.rel (0) target = $region13
    $region12: #{tpu_custom_call.1} parent=1 // pred_region
      _
    $region13: #{tpu_custom_call.1} parent=1 // pred_fallthru
      _
    // Predicated region
    $region14: #{tpu_custom_call.1} parent=1 // pred_check
      _
    $region15: #{tpu_custom_call.1} parent=1 // pred_check_branch
      %42 = sbr.rel (0) target = $region17
    $region16: #{tpu_custom_call.1} parent=1 // pred_region
      %44 = vsyncadd [#allocation7], 0
      %s45 = sshll.u32 %s3, 4
      %s46 = int_to_ptr.hbm [resolvable:$true] %s45
      %s47 = sshll.u32 [#allocation8], 4
      %s48 = int_to_ptr.vmem [resolvable:$true] %s47
      %53 = dma.hbm_to_vmem [thread:$0]  %s46, 2048, %s48, [#allocation7], 128, 128, 8
    $region17: #{tpu_custom_call.1} parent=1 // pred_fallthru
      _
    // Predicated region
    $region18: #{tpu_custom_call.1} parent=1 // pred_check
      _
    $region19: #{tpu_custom_call.1} parent=1 // pred_check_branch
      %55 = sbr.rel (0) target = $region21
    $region20: #{tpu_custom_call.1} parent=1 // pred_region
      _
    $region21: #{tpu_custom_call.1} parent=1 // pred_fallthru
      _
    // Predicated region
    $region22: #{tpu_custom_call.1} parent=1 // pred_check
      _
    $region23: #{tpu_custom_call.1} parent=1 // pred_check_branch
      %57 = sbr.rel (0) target = $region25
    $region24: #{tpu_custom_call.1} parent=1 // pred_region
      %59 = dma.done [#allocation4], 256
    $region25: #{tpu_custom_call.1} parent=1 // pred_fallthru
      _
    // Predicated region
    $region26: #{tpu_custom_call.1} parent=1 // pred_check
      _
    $region27: #{tpu_custom_call.1} parent=1 // pred_check_branch
      %61 = sbr.rel (0) target = $region29
    $region28: #{tpu_custom_call.1} parent=1 // pred_region
      %63 = dma.done [#allocation7], 2048
    $region29: #{tpu_custom_call.1} parent=1 // pred_fallthru
      _
    // Predicated region
    $region30: #{tpu_custom_call.1} parent=1 // pred_check
      _
    $region31: #{tpu_custom_call.1} parent=1 // pred_check_branch
      %65 = sbr.rel (0) target = $region33
    $region32: #{tpu_custom_call.1} parent=1 // pred_region
      %67 = dma.done [#allocation7], 2048
    $region33: #{tpu_custom_call.1} parent=1 // pred_fallthru
      _
    %p68 = scmp.eq.s32.totalorder 0, 0
    // Predicated region
    $region34: #{tpu_custom_call.1} parent=1 // pred_check
      %p69 = pneg %p68
    $region35: #{tpu_custom_call.1} parent=1 // pred_check_branch
      %71 = sbr.rel (%p69) target = $region37
    $region36: #{tpu_custom_call.1} parent=1 // pred_region
      %72 = vst [vmem:[#allocation2] sm:$0xff] 0.0
      %73 = vst [vmem:[#allocation2 + $0x8] sm:$0xff] 0.0
    $region37: #{tpu_custom_call.1} parent=1 // pred_fallthru
      _
    %v74 = vld [vmem:[#allocation3] sm:$0xff]
    %v75 = vld [vmem:[#allocation3 + $0x8] sm:$0xff]
    %v76 = vld [vmem:[#allocation6] sm:$0xff]
    %v77 = vld [vmem:[#allocation6 + $0x8] sm:$0xff]
    %v78 = vld [vmem:[#allocation6 + $0x10] sm:$0xff]
    %v79 = vld [vmem:[#allocation6 + $0x18] sm:$0xff]
    %v80 = vld [vmem:[#allocation6 + $0x20] sm:$0xff]
    %v81 = vld [vmem:[#allocation6 + $0x28] sm:$0xff]
    %v82 = vld [vmem:[#allocation6 + $0x30] sm:$0xff]
    %v83 = vld [vmem:[#allocation6 + $0x38] sm:$0xff]
    %v84 = vld [vmem:[#allocation6 + $0x40] sm:$0xff]
    %v85 = vld [vmem:[#allocation6 + $0x48] sm:$0xff]
    %v86 = vld [vmem:[#allocation6 + $0x50] sm:$0xff]
    %v87 = vld [vmem:[#allocation6 + $0x58] sm:$0xff]
    %v88 = vld [vmem:[#allocation6 + $0x60] sm:$0xff]
    %v89 = vld [vmem:[#allocation6 + $0x68] sm:$0xff]
    %v90 = vld [vmem:[#allocation6 + $0x70] sm:$0xff]
    %v91 = vld [vmem:[#allocation6 + $0x78] sm:$0xff]
    %v92 = vld [vmem:[%s2] sm:$0x1]
    %v94 = vperm.slane %v92, 0
    %96 = vmatpush.msra.mxu0 %v91
    %97 = vmatpush.msra.mxu0 %v90
    %98 = vmatpush.msra.mxu0 %v89
    %99 = vmatpush.msra.mxu0 %v88
    %100 = vmatpush.msra.mxu0 %v87
    %101 = vmatpush.msra.mxu0 %v86
    %102 = vmatpush.msra.mxu0 %v85
    %103 = vmatpush.msra.mxu0 %v84
    %104 = vmatpush.msra.mxu0 %v83
    %105 = vmatpush.msra.mxu0 %v82
    %106 = vmatpush.msra.mxu0 %v81
    %107 = vmatpush.msra.mxu0 %v80
    %108 = vmatpush.msra.mxu0 %v79
    %109 = vmatpush.msra.mxu0 %v78
    %110 = vmatpush.msra.mxu0 %v77
    %111 = vmatpush.msra.mxu0 %v76
    %112 = vmatmul.f32.gmra.mxu0 %v74
    %v113 = vpop.f32.mrf.mxu0
    %v114 = vadd.f32 %v94, %v113
    %115 = vmatmul.f32.gmra.mxu0 %v75
    %v116 = vpop.f32.mrf.mxu0
    %v117 = vadd.f32 %v94, %v116
    %118 = vdwg.mxu0
    %v119 = vmul.f32 %v114, 0.7978846
    %v120 = vmul.f32 %v117, 0.7978846
    %v121 = vmul.f32 %v114, %v114
    %v122 = vmul.f32 %v117, %v117
    %v123 = vmul.f32 %v121, 0.044715
    %v124 = vmul.f32 %v122, 0.044715
    %v125 = vadd.f32 %v123, 1.0
    %v126 = vadd.f32 %v124, 1.0
    %v127 = vmul.f32 %v119, %v125
    %v128 = vmul.f32 %v120, %v126
    %v129 = vtanh.pop %v127
    %v130 = vtanh.pop %v128
    %v131 = vmul.f32 %v129, 0.5
    %v132 = vmul.f32 %v130, 0.5
    %v133 = vadd.f32 %v131, 0.5
    %v134 = vadd.f32 %v132, 0.5
    %v135 = vmul.f32 %v114, %v133
    %v136 = vmul.f32 %v117, %v134
    %v137 = vld [vmem:[#allocation2] sm:$0xff]
    %v138 = vld [vmem:[#allocation2 + $0x8] sm:$0xff]
    %v139 = vld [vmem:[#allocation8] sm:$0xff]
    %v140 = vld [vmem:[#allocation8 + $0x8] sm:$0xff]
    %v141 = vld [vmem:[#allocation8 + $0x10] sm:$0xff]
    %v142 = vld [vmem:[#allocation8 + $0x18] sm:$0xff]
    %v143 = vld [vmem:[#allocation8 + $0x20] sm:$0xff]
    %v144 = vld [vmem:[#allocation8 + $0x28] sm:$0xff]
    %v145 = vld [vmem:[#allocation8 + $0x30] sm:$0xff]
    %v146 = vld [vmem:[#allocation8 + $0x38] sm:$0xff]
    %v147 = vld [vmem:[#allocation8 + $0x40] sm:$0xff]
    %v148 = vld [vmem:[#allocation8 + $0x48] sm:$0xff]
    %v149 = vld [vmem:[#allocation8 + $0x50] sm:$0xff]
    %v150 = vld [vmem:[#allocation8 + $0x58] sm:$0xff]
    %v151 = vld [vmem:[#allocation8 + $0x60] sm:$0xff]
    %v152 = vld [vmem:[#allocation8 + $0x68] sm:$0xff]
    %v153 = vld [vmem:[#allocation8 + $0x70] sm:$0xff]
    %v154 = vld [vmem:[#allocation8 + $0x78] sm:$0xff]
    %155 = vmatpush.msra.mxu0 %v154
    %156 = vmatpush.msra.mxu0 %v153
    %157 = vmatpush.msra.mxu0 %v152
    %158 = vmatpush.msra.mxu0 %v151
    %159 = vmatpush.msra.mxu0 %v150
    %160 = vmatpush.msra.mxu0 %v149
    %161 = vmatpush.msra.mxu0 %v148
    %162 = vmatpush.msra.mxu0 %v147
    %163 = vmatpush.msra.mxu0 %v146
    %164 = vmatpush.msra.mxu0 %v145
    %165 = vmatpush.msra.mxu0 %v144
    %166 = vmatpush.msra.mxu0 %v143
    %167 = vmatpush.msra.mxu0 %v142
    %168 = vmatpush.msra.mxu0 %v141
    %169 = vmatpush.msra.mxu0 %v140
    %170 = vmatpush.msra.mxu0 %v139
    %171 = vmatmul.f32.gmra.mxu0 %v135
    %v172 = vpop.f32.mrf.mxu0
    %v173 = vadd.f32 0.0, %v172
    %174 = vmatmul.f32.gmra.mxu0 %v136
    %v175 = vpop.f32.mrf.mxu0
    %v176 = vadd.f32 0.0, %v175
    %177 = vdwg.mxu0
    %v178 = vadd.f32 %v137, %v173
    %v179 = vadd.f32 %v138, %v176
    %180 = vst [vmem:[#allocation2] sm:$0xff] %v178
    %181 = vst [vmem:[#allocation2 + $0x8] sm:$0xff] %v179
    // Predicated region
    $region38: #{tpu_custom_call.1} parent=1 // pred_check
      %p182 = pneg %p68
    $region39: #{tpu_custom_call.1} parent=1 // pred_check_branch
      %184 = sbr.rel (%p182) target = $region41
    $region40: #{tpu_custom_call.1} parent=1 // pred_region
      %v185 = vld [vmem:[#allocation2] sm:$0xff]
      %v186 = vld [vmem:[#allocation2 + $0x8] sm:$0xff]
      %v187 = vld [vmem:[%s4] sm:$0x1]
      %v189 = vperm.slane %v187, 0
      %v191 = vadd.f32 %v185, %v189
      %v192 = vadd.f32 %v186, %v189
      %193 = vst [vmem:[#allocation9] sm:$0xff] %v191
      %194 = vst [vmem:[#allocation9 + $0x8] sm:$0xff] %v192
    $region41: #{tpu_custom_call.1} parent=1 // pred_fallthru
      _
    // Predicated region
    $region42: #{tpu_custom_call.1} parent=1 // pred_check
      _
    $region43: #{tpu_custom_call.1} parent=1 // pred_check_branch
      %196 = sbr.rel (0) target = $region45
    $region44: #{tpu_custom_call.1} parent=1 // pred_region
      %198 = vsyncadd [#allocation5], 0
      %s199 = sshll.u32 [#allocation9], 4
      %s200 = int_to_ptr.vmem [resolvable:$true] %s199
      %s201 = sshll.u32 %s5, 4
      %s202 = int_to_ptr.hbm [resolvable:$true] %s201
      %207 = dma.vmem_to_hbm [thread:$0]  %s200, 256, %s202, [#allocation5], 128, 128, 8
    $region45: #{tpu_custom_call.1} parent=1 // pred_fallthru
      _
    // Predicated region
    $region46: #{tpu_custom_call.1} parent=1 // pred_check
      _
    $region47: #{tpu_custom_call.1} parent=1 // pred_check_branch
      %209 = sbr.rel (0) target = $region49
    $region48: #{tpu_custom_call.1} parent=1 // pred_region
      %211 = dma.done [#allocation5], 256
    $region49: #{tpu_custom_call.1} parent=1 // pred_fallthru
      _
    %212 = vsyncpa [#allocation4], 1
    %213 = vsyncpa [#allocation7], 1
    %214 = vsyncpa [#allocation5], 1

</llo_original>
